<compile_context>
chip_gen: v7x
topology: tpu7x:2x2x1
jax: 0.10.0
libtpu: 0.0.40
codegen_flags: <defaults>
</compile_context>

<pallas_src>
import jax
import jax.numpy as jnp
from jax.experimental import pallas as pl
from jax.experimental.pallas import tpu as pltpu

_LANES = 1024                        # lane-dense last dim (multiple of 128)
_SUBLANES = 8                        # sublane alignment for f32 tiles
_TARGET_BLOCK_BYTES = 2 * 1024 * 1024   # ~2 MiB per block (8 MiB resident w/ double buffering)
_MIN_PALLAS_BYTES = 256 * 1024       # below this, XLA's fused where wins (launch overhead dominates)
_MIN_GRID_STEPS = 4                  # keep enough steps for the BlockSpec pipeline to overlap


def _sign_binarize_kernel(x_ref, o_ref):
    x = x_ref[...]
    one = jnp.ones((), dtype=x.dtype)
    # input >= 0 -> +1 ; input < 0 -> -1   (matches SignActivation.forward)
    o_ref[...] = jnp.where(x >= 0, one, -one)


def _sign_jnp(x: jax.Array) -> jax.Array:
    one = jnp.ones((), dtype=x.dtype)
    return jnp.where(x >= 0, one, -one)


def binarize(x: jax.Array, *, min_pallas_bytes: int = _MIN_PALLAS_BYTES) -> jax.Array:
    """Elementwise sign binarization; lane-aligned large inputs go through a
    tiled, pipelined Pallas TPU kernel, everything else through fused jnp.where."""
    orig_shape = x.shape
    n = x.size
    itemsize = jnp.dtype(x.dtype).itemsize

    # Fast path: tiny tensors (launch/plumbing overhead dominates) or ragged
    # sizes (would need pad + slice = 2 extra full HBM passes for a purely
    # memory-bound op).  XLA fuses this into one read+write pass.
    if n == 0 or n * itemsize < min_pallas_bytes or n % _LANES != 0:
        return _sign_jnp(x)

    rows = n // _LANES
    x2d = x.reshape(rows, _LANES)   # lane-dense slab, no padding needed

    # Dtype-aware block rows targeting ~2 MiB per block (in bytes).
    block_rows = max(_SUBLANES, _TARGET_BLOCK_BYTES // (_LANES * itemsize))
    # Keep at least ~_MIN_GRID_STEPS grid steps so double-buffering actually
    # overlaps DMA-in / compute / DMA-out (and v7x cores both get work).
    if rows > _SUBLANES * _MIN_GRID_STEPS:
        cap = pl.cdiv(pl.cdiv(rows, _MIN_GRID_STEPS), _SUBLANES) * _SUBLANES
        block_rows = min(block_rows, cap)
    tm = min(block_rows, rows)
    # tm is a multiple of 8 whenever tm < rows; if tm == rows it spans the full
    # dim, which satisfies the (8, 128) block constraint either way.

    grid = (pl.cdiv(rows, tm),)

    out2d = pl.pallas_call(
        _sign_binarize_kernel,
        out_shape=jax.ShapeDtypeStruct((rows, _LANES), x.dtype),
        grid=grid,
        in_specs=[pl.BlockSpec((tm, _LANES), lambda i: (i, 0))],
        out_specs=pl.BlockSpec((tm, _LANES), lambda i: (i, 0)),
        compiler_params=pltpu.CompilerParams(
            dimension_semantics=("parallel",),
        ),
        cost_estimate=pl.CostEstimate(
            flops=n, transcendentals=0, bytes_accessed=2 * n * itemsize),
    )(x2d)

    return out2d.reshape(orig_shape)


if __name__ == "__main__":
    root = jax.random.PRNGKey(0)
    k0, k1, k2, k3 = jax.random.split(root, 4)

    # 1) Conv-style feature map large enough (1 MiB f32, lane-aligned) to take
    #    the default Pallas path: rows=256, tm=64, grid=(4,).
    x = jax.random.normal(k0, (2, 8, 128, 128), dtype=jnp.float32)
    out = jax.block_until_ready(binarize(x))
    ref = jnp.where(x >= 0, 1.0, -1.0).astype(x.dtype)
    assert out.shape == x.shape and out.dtype == x.dtype
    assert bool(jnp.all(out == ref))

    # 2) Same shape in bf16 (exercises dtype-aware block sizing).
    xb = jax.random.normal(k1, (2, 8, 128, 128), dtype=jnp.bfloat16)
    outb = jax.block_until_ready(binarize(xb))
    refb = jnp.where(xb >= 0, 1.0, -1.0).astype(xb.dtype)
    assert outb.shape == xb.shape and outb.dtype == xb.dtype
    assert bool(jnp.all(outb == refb))

    # 3) Canonical small NCHW input (2048 elems): forced through the Pallas
    #    kernel (full-dim block, grid=(1,)) to validate the kernel itself, and
    #    through the default fast path.
    x_small = jax.random.normal(k2, (2, 4, 16, 16), dtype=jnp.float32)
    ref_small = jnp.where(x_small >= 0, 1.0, -1.0).astype(x_small.dtype)
    out_small_forced = jax.block_until_ready(binarize(x_small, min_pallas_bytes=0))
    out_small_default = jax.block_until_ready(binarize(x_small))
    assert bool(jnp.all(out_small_forced == ref_small))
    assert bool(jnp.all(out_small_default == ref_small))

    # 4) Ragged spatial shape (7x7): takes the fused jnp.where fallback
    #    (no pad/slice extra HBM passes).
    x_rag = jax.random.normal(k3, (2, 3, 7, 7), dtype=jnp.float32)
    out_rag = jax.block_until_ready(binarize(x_rag))
    ref_rag = jnp.where(x_rag >= 0, 1.0, -1.0).astype(x_rag.dtype)
    assert out_rag.shape == x_rag.shape and out_rag.dtype == x_rag.dtype
    assert bool(jnp.all(out_rag == ref_rag))

    print("KERNEL_OK")
</pallas_src>

<mosaic_0001>
module attributes {stable_mosaic.version = 11 : i64} {
  func.func @_sign_binarize_kernel(%arg0: i32, %arg1: memref<64x1024xf32, #tpu.memory_space<vmem>>, %arg2: memref<64x1024xf32, #tpu.memory_space<vmem>>) attributes {dimension_semantics = [#tpu.dimension_semantics<parallel>], iteration_bounds = array<i64: 4>, scalar_prefetch = 0 : i64, scratch_operands = 0 : i64, tpu.core_type = #tpu.core_type<tc>, window_params = [{transform_indices = @transform_0, window_bounds = array<i64: 64, 1024>}, {transform_indices = @transform_1, window_bounds = array<i64: 64, 1024>}]} {
    %c0 = arith.constant 0 : index
    %c0_0 = arith.constant 0 : index
    %0 = vector.load %arg1[%c0, %c0_0] : memref<64x1024xf32, #tpu.memory_space<vmem>>, vector<64x1024xf32>
    %cst = arith.constant 0.000000e+00 : f32
    %1 = vector.broadcast %cst : f32 to vector<64x1024xf32>
    %2 = arith.cmpf oge, %0, %1 : vector<64x1024xf32>
    %cst_1 = arith.constant 0.000000e+00 : f32
    %cst_2 = arith.constant 1.000000e+00 : f32
    %3 = arith.subf %cst_1, %cst_2 : f32
    %cst_3 = arith.constant 1.000000e+00 : f32
    %4 = vector.broadcast %cst_3 : f32 to vector<64x1024xf32>
    %5 = vector.broadcast %3 : f32 to vector<64x1024xf32>
    %6 = arith.select %2, %4, %5 : vector<64x1024xi1>, vector<64x1024xf32>
    %c0_4 = arith.constant 0 : index
    %c0_5 = arith.constant 0 : index
    %7 = vector.load %arg2[%c0_4, %c0_5] : memref<64x1024xf32, #tpu.memory_space<vmem>>, vector<64x1024xf32>
    tpu.vector_store %arg2[%c0_4, %c0_5], %6 {strides = array<i32>} : memref<64x1024xf32, #tpu.memory_space<vmem>>, vector<64x1024xf32>,
    return
  }
  func.func @transform_0(%arg0: i32) -> (i32, i32) {
    %c0_i32 = arith.constant 0 : i32
    %c0_i32_0 = arith.constant 0 : i32
    return %arg0, %c0_i32 : i32, i32
  }
  func.func @transform_1(%arg0: i32) -> (i32, i32) {
    %c0_i32 = arith.constant 0 : i32
    %c0_i32_0 = arith.constant 0 : i32
    return %arg0, %c0_i32 : i32, i32
  }
}

</mosaic_0001>

<llo_original>
// kernel: tpu_custom_call.1
$region0: #{tpu_custom_call.1}
  #allocation0 [shape = 'u32[]', space=smem, size = 0x4, offset = 0x4, fixed_abs, tag = 'smem constant byte address 0x4 - core index']
  #allocation1 [shape = 'u32[144,128]{1,0:T(1,128)}', space=vmem, size = 0x12000, scoped, tag = 'internal scratch']
  %s0 = inlined_call_operand.hbm [shape: f32[256,1024], index: 0, kind: input, shape index: {}]
  %s1 = inlined_call_operand.hbm [shape: f32[256,1024], index: 1, kind: output, shape index: {}]
  %s2 = sld [smem:[#allocation0]]
  $region41: #{tpu_custom_call.1} parent=0
    _
  %s4 = ssub.s32 1, %s2
  %s5 = scalar_select 0, %s4, %s2
  $region1: #{tpu_custom_call.1} parent=0
    #allocation2 [shape = 'u8[524288]{0}', space=vmem, size = 0x80000, scoped, tag = 'input window, operand 0']
    #allocation3 [shape = 's32[2]{0}', space=sflag, size = 0x8, scoped, tag = 'scoped memory for tpu_custom_call.1']
    #allocation4 [shape = 's32[2]{0}', space=sflag, size = 0x8, scoped, tag = 'scoped memory for tpu_custom_call.1']
    #allocation5 [shape = 'u8[524288]{0}', space=vmem, size = 0x80000, scoped, tag = 'output window, operand 0']
    %6 = vsyncpa [#allocation3], 0
    %s7 = scalar_lea.sflag [#allocation3], 1
    %8 = vsyncpa %s7, 0
    %9 = vsyncpa [#allocation4], 0
    %s10 = scalar_lea.sflag [#allocation4], 1
    %11 = vsyncpa %s10, 0
    loop: start=0, step=1, limit=6
    $region2: #{tpu_custom_call.1} parent=1 // loop_pre_header
      _
    $region3: #{tpu_custom_call.1} parent=1 // loop_header
      %s13 = sphi 0, %s17
      %p14 = scmp.ge.s32.totalorder %s13, 6
      %s23 = sphi 0, %s25
      %s26 = sphi 0, %s23
      %s27 = sphi 0, %s26
      %s43 = sphi 0, %s27
      %s49 = sphi 0, %s51
      %s52 = sphi 0, %s49
      %s53 = sphi 0, %s52
      %s69 = sphi 0, %s53
    $region4: #{tpu_custom_call.1} parent=1 // loop_header_branch
      %16 = sbr.rel (%p14) target = $region8
    $region5: #{tpu_custom_call.1} parent=1 // loop_body
      %s18 = ssub.s32 %s13, 1
      %s19 = ssub.s32 %s13, 2
      %s20 = sadd.s32 %s13, 1
      %s21 = ssub.s32 %s13, %s20
      %p22 = scmp.eq.s32.totalorder %s21, 0
      %s24 = sadd.s32 %s23, 1
      %s25 = scalar_select %p22, %s23, %s24
      %p28 = pneg %p22
      %p29 = scmp.eq.s32.totalorder %s13, 3
      %p30 = por %p28, %p29
      %p31 = scmp.ne.s32.totalorder %s23, %s26
      %p32 = scmp.eq.s32.totalorder %s13, 0
      %p33 = por %p31, %p32
      %p34 = scmp.ne.s32.totalorder %s23, %s26
      %p35 = scmp.eq.s32.totalorder %s18, 3
      %p36 = por %p34, %p35
      %p37 = scmp.ne.s32.totalorder %s26, %s27
      %p38 = scmp.eq.s32.totalorder %s18, 0
      %p39 = por %p37, %p38
      %p40 = scmp.ne.s32.totalorder %s26, %s27
      %p41 = scmp.eq.s32.totalorder %s19, 3
      %p42 = por %p40, %p41
      %p44 = scmp.ne.s32.totalorder %s27, %s43
      %p45 = scmp.eq.s32.totalorder %s19, 0
      %p46 = por %p44, %p45
      %s47 = ssub.s32 %s13, %s20
      %p48 = scmp.eq.s32.totalorder %s47, 0
      %s50 = sadd.s32 %s49, 1
      %s51 = scalar_select %p48, %s49, %s50
      %p54 = pneg %p48
      %p55 = scmp.eq.s32.totalorder %s13, 3
      %p56 = por %p54, %p55
      %p57 = scmp.ne.s32.totalorder %s49, %s52
      %p58 = scmp.eq.s32.totalorder %s13, 0
      %p59 = por %p57, %p58
      %p60 = scmp.ne.s32.totalorder %s49, %s52
      %p61 = scmp.eq.s32.totalorder %s18, 3
      %p62 = por %p60, %p61
      %p63 = scmp.ne.s32.totalorder %s52, %s53
      %p64 = scmp.eq.s32.totalorder %s18, 0
      %p65 = por %p63, %p64
      %p66 = scmp.ne.s32.totalorder %s52, %s53
      %p67 = scmp.eq.s32.totalorder %s19, 3
      %p68 = por %p66, %p67
      %p70 = scmp.ne.s32.totalorder %s53, %s69
      %p71 = scmp.eq.s32.totalorder %s19, 0
      %p72 = por %p70, %p71
      %p73 = scmp.le.s32.totalorder 1, %s13
      %p74 = scmp.lt.s32.totalorder %s13, 5
      %p75 = pnand %p73, %p74
      %p76 = pneg %p75
      // Predicated region
      $region9: #{tpu_custom_call.1} parent=5 // pred_check
        _
      $region10: #{tpu_custom_call.1} parent=5 // pred_check_branch
        %78 = sbr.rel (%p75) target = $region12
      $region11: #{tpu_custom_call.1} parent=5 // pred_region
        %s79 = ssub.s32 %s13, 1
      $region12: #{tpu_custom_call.1} parent=5 // pred_fallthru
        _
      %p80 = scmp.lt.s32.totalorder %s13, 4
      // Predicated region
      $region13: #{tpu_custom_call.1} parent=5 // pred_check
        %p81 = pneg %p80
      $region14: #{tpu_custom_call.1} parent=5 // pred_check_branch
        %83 = sbr.rel (%p81) target = $region16
      $region15: #{tpu_custom_call.1} parent=5 // pred_region
        // Predicated region
        $region17: #{tpu_custom_call.1} parent=15 // pred_check
          %p84 = pneg %p33
        $region18: #{tpu_custom_call.1} parent=15 // pred_check_branch
          %86 = sbr.rel (%p84) target = $region20
        $region19: #{tpu_custom_call.1} parent=15 // pred_region
          %s87 = sand.u32 %s23, 1
          %s88 = scalar_lea.sflag [#allocation3], %s87
          %s89 = sand.u32 %s23, 1
          %s90 = smul.addr %s89, 512
          %s91 = scalar_lea.vmem [#allocation2], %s90
          %s92 = smul.u32 8, %s13
          %s94 = ssub.s32 8192, 8192
          %95 = vsyncadd %s88, %s94
          %s96 = smul.addr %s92, 8
          %s97 = smul.addr %s96, 128
          %s98 = scalar_lea.hbm %s0, %s97
          %s99 = sshll.u32 %s91, 4
          %s100 = int_to_ptr.vmem [resolvable:$true] %s99
          %105 = dma.hbm_to_vmem [thread:$0]  %s98, 8192, %s100, %s88, 1024, 1024, 64
        $region20: #{tpu_custom_call.1} parent=15 // pred_fallthru
          _
      $region16: #{tpu_custom_call.1} parent=5 // pred_fallthru
        _
      %p106 = scmp.le.s32.totalorder 1, %s13
      %p107 = scmp.lt.s32.totalorder %s13, 5
      %p108 = pnand %p106, %p107
      %p109 = pneg %p108
      // Predicated region
      $region21: #{tpu_custom_call.1} parent=5 // pred_check
        _
      $region22: #{tpu_custom_call.1} parent=5 // pred_check_branch
        %111 = sbr.rel (%p108) target = $region24
      $region23: #{tpu_custom_call.1} parent=5 // pred_region
        %s112 = ssub.s32 %s13, 1
        %s113 = sand.u32 %s26, 1
        %s114 = scalar_lea.sflag [#allocation3], %s113
        %s115 = sand.u32 %s26, 1
        %s116 = smul.addr %s115, 512
        %s117 = scalar_lea.vmem [#allocation2], %s116
        // Predicated region
        $region25: #{tpu_custom_call.1} parent=23 // pred_check
          %p118 = pneg %p39
        $region26: #{tpu_custom_call.1} parent=23 // pred_check_branch
          %120 = sbr.rel (%p118) target = $region28
        $region27: #{tpu_custom_call.1} parent=23 // pred_region
          %121 = dma.done %s114, 8192
        $region28: #{tpu_custom_call.1} parent=23 // pred_fallthru
          _
        %s122 = sand.u32 %s26, 1
        %s123 = scalar_lea.sflag [#allocation3], %s122
        %s124 = sand.u32 %s26, 1
        %s125 = smul.addr %s124, 512
        %s126 = scalar_lea.vmem [#allocation2], %s125
        %p127 = pneg %p39
        %p128 = pneg %p36
        %p129 = pneg %p65
        %p130 = pneg %p62
        %s131 = sand.u32 %s52, 1
        %s132 = scalar_lea.sflag [#allocation4], %s131
        %s133 = sand.u32 %s52, 1
        %s134 = smul.addr %s133, 512
        %s135 = scalar_lea.vmem [#allocation5], %s134
        %s136 = smul.u32 8, %s18
        %s137 = smul.u32 8, %s18
        %v138 = vld [vmem:[%s117] sm:$0xff]
        %v139 = vld [vmem:[%s117 + $0x8] sm:$0xff]
        %v140 = vld [vmem:[%s117 + $0x10] sm:$0xff]
        %v141 = vld [vmem:[%s117 + $0x18] sm:$0xff]
        %v142 = vld [vmem:[%s117 + $0x20] sm:$0xff]
        %v143 = vld [vmem:[%s117 + $0x28] sm:$0xff]
        %v144 = vld [vmem:[%s117 + $0x30] sm:$0xff]
        %v145 = vld [vmem:[%s117 + $0x38] sm:$0xff]
        %v146 = vld [vmem:[%s117 + $0x40] sm:$0xff]
        %v147 = vld [vmem:[%s117 + $0x48] sm:$0xff]
        %v148 = vld [vmem:[%s117 + $0x50] sm:$0xff]
        %v149 = vld [vmem:[%s117 + $0x58] sm:$0xff]
        %v150 = vld [vmem:[%s117 + $0x60] sm:$0xff]
        %v151 = vld [vmem:[%s117 + $0x68] sm:$0xff]
        %v152 = vld [vmem:[%s117 + $0x70] sm:$0xff]
        %v153 = vld [vmem:[%s117 + $0x78] sm:$0xff]
        %v154 = vld [vmem:[%s117 + $0x80] sm:$0xff]
        %v155 = vld [vmem:[%s117 + $0x88] sm:$0xff]
        %v156 = vld [vmem:[%s117 + $0x90] sm:$0xff]
        %v157 = vld [vmem:[%s117 + $0x98] sm:$0xff]
        %v158 = vld [vmem:[%s117 + $0xa0] sm:$0xff]
        %v159 = vld [vmem:[%s117 + $0xa8] sm:$0xff]
        %v160 = vld [vmem:[%s117 + $0xb0] sm:$0xff]
        %v161 = vld [vmem:[%s117 + $0xb8] sm:$0xff]
        %v162 = vld [vmem:[%s117 + $0xc0] sm:$0xff]
        %v163 = vld [vmem:[%s117 + $0xc8] sm:$0xff]
        %v164 = vld [vmem:[%s117 + $0xd0] sm:$0xff]
        %v165 = vld [vmem:[%s117 + $0xd8] sm:$0xff]
        %v166 = vld [vmem:[%s117 + $0xe0] sm:$0xff]
        %v167 = vld [vmem:[%s117 + $0xe8] sm:$0xff]
        %v168 = vld [vmem:[%s117 + $0xf0] sm:$0xff]
        %v169 = vld [vmem:[%s117 + $0xf8] sm:$0xff]
        %v170 = vld [vmem:[%s117 + $0x100] sm:$0xff]
        %v171 = vld [vmem:[%s117 + $0x108] sm:$0xff]
        %v172 = vld [vmem:[%s117 + $0x110] sm:$0xff]
        %v173 = vld [vmem:[%s117 + $0x118] sm:$0xff]
        %v174 = vld [vmem:[%s117 + $0x120] sm:$0xff]
        %v175 = vld [vmem:[%s117 + $0x128] sm:$0xff]
        %v176 = vld [vmem:[%s117 + $0x130] sm:$0xff]
        %v177 = vld [vmem:[%s117 + $0x138] sm:$0xff]
        %v178 = vld [vmem:[%s117 + $0x140] sm:$0xff]
        %v179 = vld [vmem:[%s117 + $0x148] sm:$0xff]
        %v180 = vld [vmem:[%s117 + $0x150] sm:$0xff]
        %v181 = vld [vmem:[%s117 + $0x158] sm:$0xff]
        %v182 = vld [vmem:[%s117 + $0x160] sm:$0xff]
        %v183 = vld [vmem:[%s117 + $0x168] sm:$0xff]
        %v184 = vld [vmem:[%s117 + $0x170] sm:$0xff]
        %v185 = vld [vmem:[%s117 + $0x178] sm:$0xff]
        %v186 = vld [vmem:[%s117 + $0x180] sm:$0xff]
        %v187 = vld [vmem:[%s117 + $0x188] sm:$0xff]
        %v188 = vld [vmem:[%s117 + $0x190] sm:$0xff]
        %v189 = vld [vmem:[%s117 + $0x198] sm:$0xff]
        %v190 = vld [vmem:[%s117 + $0x1a0] sm:$0xff]
        %v191 = vld [vmem:[%s117 + $0x1a8] sm:$0xff]
        %v192 = vld [vmem:[%s117 + $0x1b0] sm:$0xff]
        %v193 = vld [vmem:[%s117 + $0x1b8] sm:$0xff]
        %v194 = vld [vmem:[%s117 + $0x1c0] sm:$0xff]
        %v195 = vld [vmem:[%s117 + $0x1c8] sm:$0xff]
        %v196 = vld [vmem:[%s117 + $0x1d0] sm:$0xff]
        %v197 = vld [vmem:[%s117 + $0x1d8] sm:$0xff]
        %v198 = vld [vmem:[%s117 + $0x1e0] sm:$0xff]
        %v199 = vld [vmem:[%s117 + $0x1e8] sm:$0xff]
        %v200 = vld [vmem:[%s117 + $0x1f0] sm:$0xff]
        %v201 = vld [vmem:[%s117 + $0x1f8] sm:$0xff]
        %vm202 = vcmp.ge.f32.partialorder %v138, 0.0
        %vm203 = vcmp.ge.f32.partialorder %v139, 0.0
        %vm204 = vcmp.ge.f32.partialorder %v140, 0.0
        %vm205 = vcmp.ge.f32.partialorder %v141, 0.0
        %vm206 = vcmp.ge.f32.partialorder %v142, 0.0
        %vm207 = vcmp.ge.f32.partialorder %v143, 0.0
        %vm208 = vcmp.ge.f32.partialorder %v144, 0.0
        %vm209 = vcmp.ge.f32.partialorder %v145, 0.0
        %vm210 = vcmp.ge.f32.partialorder %v146, 0.0
        %vm211 = vcmp.ge.f32.partialorder %v147, 0.0
        %vm212 = vcmp.ge.f32.partialorder %v148, 0.0
        %vm213 = vcmp.ge.f32.partialorder %v149, 0.0
        %vm214 = vcmp.ge.f32.partialorder %v150, 0.0
        %vm215 = vcmp.ge.f32.partialorder %v151, 0.0
        %vm216 = vcmp.ge.f32.partialorder %v152, 0.0
        %vm217 = vcmp.ge.f32.partialorder %v153, 0.0
        %vm218 = vcmp.ge.f32.partialorder %v154, 0.0
        %vm219 = vcmp.ge.f32.partialorder %v155, 0.0
        %vm220 = vcmp.ge.f32.partialorder %v156, 0.0
        %vm221 = vcmp.ge.f32.partialorder %v157, 0.0
        %vm222 = vcmp.ge.f32.partialorder %v158, 0.0
        %vm223 = vcmp.ge.f32.partialorder %v159, 0.0
        %vm224 = vcmp.ge.f32.partialorder %v160, 0.0
        %vm225 = vcmp.ge.f32.partialorder %v161, 0.0
        %vm226 = vcmp.ge.f32.partialorder %v162, 0.0
        %vm227 = vcmp.ge.f32.partialorder %v163, 0.0
        %vm228 = vcmp.ge.f32.partialorder %v164, 0.0
        %vm229 = vcmp.ge.f32.partialorder %v165, 0.0
        %vm230 = vcmp.ge.f32.partialorder %v166, 0.0
        %vm231 = vcmp.ge.f32.partialorder %v167, 0.0
        %vm232 = vcmp.ge.f32.partialorder %v168, 0.0
        %vm233 = vcmp.ge.f32.partialorder %v169, 0.0
        %vm234 = vcmp.ge.f32.partialorder %v170, 0.0
        %vm235 = vcmp.ge.f32.partialorder %v171, 0.0
        %vm236 = vcmp.ge.f32.partialorder %v172, 0.0
        %vm237 = vcmp.ge.f32.partialorder %v173, 0.0
        %vm238 = vcmp.ge.f32.partialorder %v174, 0.0
        %vm239 = vcmp.ge.f32.partialorder %v175, 0.0
        %vm240 = vcmp.ge.f32.partialorder %v176, 0.0
        %vm241 = vcmp.ge.f32.partialorder %v177, 0.0
        %vm242 = vcmp.ge.f32.partialorder %v178, 0.0
        %vm243 = vcmp.ge.f32.partialorder %v179, 0.0
        %vm244 = vcmp.ge.f32.partialorder %v180, 0.0
        %vm245 = vcmp.ge.f32.partialorder %v181, 0.0
        %vm246 = vcmp.ge.f32.partialorder %v182, 0.0
        %vm247 = vcmp.ge.f32.partialorder %v183, 0.0
        %vm248 = vcmp.ge.f32.partialorder %v184, 0.0
        %vm249 = vcmp.ge.f32.partialorder %v185, 0.0
        %vm250 = vcmp.ge.f32.partialorder %v186, 0.0
        %vm251 = vcmp.ge.f32.partialorder %v187, 0.0
        %vm252 = vcmp.ge.f32.partialorder %v188, 0.0
        %vm253 = vcmp.ge.f32.partialorder %v189, 0.0
        %vm254 = vcmp.ge.f32.partialorder %v190, 0.0
        %vm255 = vcmp.ge.f32.partialorder %v191, 0.0
        %vm256 = vcmp.ge.f32.partialorder %v192, 0.0
        %vm257 = vcmp.ge.f32.partialorder %v193, 0.0
        %vm258 = vcmp.ge.f32.partialorder %v194, 0.0
        %vm259 = vcmp.ge.f32.partialorder %v195, 0.0
        %vm260 = vcmp.ge.f32.partialorder %v196, 0.0
        %vm261 = vcmp.ge.f32.partialorder %v197, 0.0
        %vm262 = vcmp.ge.f32.partialorder %v198, 0.0
        %vm263 = vcmp.ge.f32.partialorder %v199, 0.0
        %vm264 = vcmp.ge.f32.partialorder %v200, 0.0
        %vm265 = vcmp.ge.f32.partialorder %v201, 0.0
        %v266 = vsel %vm202, 1.0, -1.0
        %v267 = vsel %vm203, 1.0, -1.0
        %v268 = vsel %vm204, 1.0, -1.0
        %v269 = vsel %vm205, 1.0, -1.0
        %v270 = vsel %vm206, 1.0, -1.0
        %v271 = vsel %vm207, 1.0, -1.0
        %v272 = vsel %vm208, 1.0, -1.0
        %v273 = vsel %vm209, 1.0, -1.0
        %v274 = vsel %vm210, 1.0, -1.0
        %v275 = vsel %vm211, 1.0, -1.0
        %v276 = vsel %vm212, 1.0, -1.0
        %v277 = vsel %vm213, 1.0, -1.0
        %v278 = vsel %vm214, 1.0, -1.0
        %v279 = vsel %vm215, 1.0, -1.0
        %v280 = vsel %vm216, 1.0, -1.0
        %v281 = vsel %vm217, 1.0, -1.0
        %v282 = vsel %vm218, 1.0, -1.0
        %v283 = vsel %vm219, 1.0, -1.0
        %v284 = vsel %vm220, 1.0, -1.0
        %v285 = vsel %vm221, 1.0, -1.0
        %v286 = vsel %vm222, 1.0, -1.0
        %v287 = vsel %vm223, 1.0, -1.0
        %v288 = vsel %vm224, 1.0, -1.0
        %v289 = vsel %vm225, 1.0, -1.0
        %v290 = vsel %vm226, 1.0, -1.0
        %v291 = vsel %vm227, 1.0, -1.0
        %v292 = vsel %vm228, 1.0, -1.0
        %v293 = vsel %vm229, 1.0, -1.0
        %v294 = vsel %vm230, 1.0, -1.0
        %v295 = vsel %vm231, 1.0, -1.0
        %v296 = vsel %vm232, 1.0, -1.0
        %v297 = vsel %vm233, 1.0, -1.0
        %v298 = vsel %vm234, 1.0, -1.0
        %v299 = vsel %vm235, 1.0, -1.0
        %v300 = vsel %vm236, 1.0, -1.0
        %v301 = vsel %vm237, 1.0, -1.0
        %v302 = vsel %vm238, 1.0, -1.0
        %v303 = vsel %vm239, 1.0, -1.0
        %v304 = vsel %vm240, 1.0, -1.0
        %v305 = vsel %vm241, 1.0, -1.0
        %v306 = vsel %vm242, 1.0, -1.0
        %v307 = vsel %vm243, 1.0, -1.0
        %v308 = vsel %vm244, 1.0, -1.0
        %v309 = vsel %vm245, 1.0, -1.0
        %v310 = vsel %vm246, 1.0, -1.0
        %v311 = vsel %vm247, 1.0, -1.0
        %v312 = vsel %vm248, 1.0, -1.0
        %v313 = vsel %vm249, 1.0, -1.0
        %v314 = vsel %vm250, 1.0, -1.0
        %v315 = vsel %vm251, 1.0, -1.0
        %v316 = vsel %vm252, 1.0, -1.0
        %v317 = vsel %vm253, 1.0, -1.0
        %v318 = vsel %vm254, 1.0, -1.0
        %v319 = vsel %vm255, 1.0, -1.0
        %v320 = vsel %vm256, 1.0, -1.0
        %v321 = vsel %vm257, 1.0, -1.0
        %v322 = vsel %vm258, 1.0, -1.0
        %v323 = vsel %vm259, 1.0, -1.0
        %v324 = vsel %vm260, 1.0, -1.0
        %v325 = vsel %vm261, 1.0, -1.0
        %v326 = vsel %vm262, 1.0, -1.0
        %v327 = vsel %vm263, 1.0, -1.0
        %v328 = vsel %vm264, 1.0, -1.0
        %v329 = vsel %vm265, 1.0, -1.0
        %330 = vst [vmem:[%s135] sm:$0xff] %v266
        %331 = vst [vmem:[%s135 + $0x8] sm:$0xff] %v267
        %332 = vst [vmem:[%s135 + $0x10] sm:$0xff] %v268
        %333 = vst [vmem:[%s135 + $0x18] sm:$0xff] %v269
        %334 = vst [vmem:[%s135 + $0x20] sm:$0xff] %v270
        %335 = vst [vmem:[%s135 + $0x28] sm:$0xff] %v271
        %336 = vst [vmem:[%s135 + $0x30] sm:$0xff] %v272
        %337 = vst [vmem:[%s135 + $0x38] sm:$0xff] %v273
        %338 = vst [vmem:[%s135 + $0x40] sm:$0xff] %v274
        %339 = vst [vmem:[%s135 + $0x48] sm:$0xff] %v275
        %340 = vst [vmem:[%s135 + $0x50] sm:$0xff] %v276
        %341 = vst [vmem:[%s135 + $0x58] sm:$0xff] %v277
        %342 = vst [vmem:[%s135 + $0x60] sm:$0xff] %v278
        %343 = vst [vmem:[%s135 + $0x68] sm:$0xff] %v279
        %344 = vst [vmem:[%s135 + $0x70] sm:$0xff] %v280
        %345 = vst [vmem:[%s135 + $0x78] sm:$0xff] %v281
        %346 = vst [vmem:[%s135 + $0x80] sm:$0xff] %v282
        %347 = vst [vmem:[%s135 + $0x88] sm:$0xff] %v283
        %348 = vst [vmem:[%s135 + $0x90] sm:$0xff] %v284
        %349 = vst [vmem:[%s135 + $0x98] sm:$0xff] %v285
        %350 = vst [vmem:[%s135 + $0xa0] sm:$0xff] %v286
        %351 = vst [vmem:[%s135 + $0xa8] sm:$0xff] %v287
        %352 = vst [vmem:[%s135 + $0xb0] sm:$0xff] %v288
        %353 = vst [vmem:[%s135 + $0xb8] sm:$0xff] %v289
        %354 = vst [vmem:[%s135 + $0xc0] sm:$0xff] %v290
        %355 = vst [vmem:[%s135 + $0xc8] sm:$0xff] %v291
        %356 = vst [vmem:[%s135 + $0xd0] sm:$0xff] %v292
        %357 = vst [vmem:[%s135 + $0xd8] sm:$0xff] %v293
        %358 = vst [vmem:[%s135 + $0xe0] sm:$0xff] %v294
        %359 = vst [vmem:[%s135 + $0xe8] sm:$0xff] %v295
        %360 = vst [vmem:[%s135 + $0xf0] sm:$0xff] %v296
        %361 = vst [vmem:[%s135 + $0xf8] sm:$0xff] %v297
        %362 = vst [vmem:[%s135 + $0x100] sm:$0xff] %v298
        %363 = vst [vmem:[%s135 + $0x108] sm:$0xff] %v299
        %364 = vst [vmem:[%s135 + $0x110] sm:$0xff] %v300
        %365 = vst [vmem:[%s135 + $0x118] sm:$0xff] %v301
        %366 = vst [vmem:[%s135 + $0x120] sm:$0xff] %v302
        %367 = vst [vmem:[%s135 + $0x128] sm:$0xff] %v303
        %368 = vst [vmem:[%s135 + $0x130] sm:$0xff] %v304
        %369 = vst [vmem:[%s135 + $0x138] sm:$0xff] %v305
        %370 = vst [vmem:[%s135 + $0x140] sm:$0xff] %v306
        %371 = vst [vmem:[%s135 + $0x148] sm:$0xff] %v307
        %372 = vst [vmem:[%s135 + $0x150] sm:$0xff] %v308
        %373 = vst [vmem:[%s135 + $0x158] sm:$0xff] %v309
        %374 = vst [vmem:[%s135 + $0x160] sm:$0xff] %v310
        %375 = vst [vmem:[%s135 + $0x168] sm:$0xff] %v311
        %376 = vst [vmem:[%s135 + $0x170] sm:$0xff] %v312
        %377 = vst [vmem:[%s135 + $0x178] sm:$0xff] %v313
        %378 = vst [vmem:[%s135 + $0x180] sm:$0xff] %v314
        %379 = vst [vmem:[%s135 + $0x188] sm:$0xff] %v315
        %380 = vst [vmem:[%s135 + $0x190] sm:$0xff] %v316
        %381 = vst [vmem:[%s135 + $0x198] sm:$0xff] %v317
        %382 = vst [vmem:[%s135 + $0x1a0] sm:$0xff] %v318
        %383 = vst [vmem:[%s135 + $0x1a8] sm:$0xff] %v319
        %384 = vst [vmem:[%s135 + $0x1b0] sm:$0xff] %v320
        %385 = vst [vmem:[%s135 + $0x1b8] sm:$0xff] %v321
        %386 = vst [vmem:[%s135 + $0x1c0] sm:$0xff] %v322
        %387 = vst [vmem:[%s135 + $0x1c8] sm:$0xff] %v323
        %388 = vst [vmem:[%s135 + $0x1d0] sm:$0xff] %v324
        %389 = vst [vmem:[%s135 + $0x1d8] sm:$0xff] %v325
        %390 = vst [vmem:[%s135 + $0x1e0] sm:$0xff] %v326
        %391 = vst [vmem:[%s135 + $0x1e8] sm:$0xff] %v327
        %392 = vst [vmem:[%s135 + $0x1f0] sm:$0xff] %v328
        %393 = vst [vmem:[%s135 + $0x1f8] sm:$0xff] %v329
        %s394 = sand.u32 %s52, 1
        %s395 = scalar_lea.sflag [#allocation4], %s394
        %s396 = sand.u32 %s52, 1
        %s397 = smul.addr %s396, 512
        %s398 = scalar_lea.vmem [#allocation5], %s397
        // Predicated region
        $region29: #{tpu_custom_call.1} parent=23 // pred_check
          %p399 = pneg %p62
        $region30: #{tpu_custom_call.1} parent=23 // pred_check_branch
          %401 = sbr.rel (%p399) target = $region32
        $region31: #{tpu_custom_call.1} parent=23 // pred_region
          %s402 = smul.u32 8, %s18
          %s404 = ssub.s32 8192, 8192
          %405 = vsyncadd %s395, %s404
          %s406 = smul.addr %s402, 8
          %s407 = smul.addr %s406, 128
          %s408 = scalar_lea.hbm %s1, %s407
          %s409 = sshll.u32 %s398, 4
          %s410 = int_to_ptr.vmem [resolvable:$true] %s409
          %415 = dma.vmem_to_hbm [thread:$0]  %s410, 8192, %s408, %s395, 1024, 1024, 64
        $region32: #{tpu_custom_call.1} parent=23 // pred_fallthru
          _
      $region24: #{tpu_custom_call.1} parent=5 // pred_fallthru
        _
      %p416 = scmp.le.s32.totalorder 2, %s13
      // Predicated region
      $region33: #{tpu_custom_call.1} parent=5 // pred_check
        %p417 = pneg %p416
      $region34: #{tpu_custom_call.1} parent=5 // pred_check_branch
        %419 = sbr.rel (%p417) target = $region36
      $region35: #{tpu_custom_call.1} parent=5 // pred_region
        %s420 = ssub.s32 %s13, 2
        // Predicated region
        $region37: #{tpu_custom_call.1} parent=35 // pred_check
          %p421 = pneg %p68
        $region38: #{tpu_custom_call.1} parent=35 // pred_check_branch
          %423 = sbr.rel (%p421) target = $region40
        $region39: #{tpu_custom_call.1} parent=35 // pred_region
          %s424 = sand.u32 %s53, 1
          %s425 = scalar_lea.sflag [#allocation4], %s424
          %s426 = sand.u32 %s53, 1
          %s427 = smul.addr %s426, 512
          %s428 = scalar_lea.vmem [#allocation5], %s427
          %429 = dma.done %s425, 8192
        $region40: #{tpu_custom_call.1} parent=35 // pred_fallthru
          _
      $region36: #{tpu_custom_call.1} parent=5 // pred_fallthru
        _
    $region6: #{tpu_custom_call.1} parent=1 // loop_footer
      %s17 = sadd.s32 1, %s13
    $region7: #{tpu_custom_call.1} parent=1 // loop_footer_branch
      %12 = sbr.rel target = $region3
    $region8: #{tpu_custom_call.1} parent=1 // loop_exit
      _
    %430 = vsyncpa [#allocation3], 1
    %s431 = scalar_lea.sflag [#allocation3], 1
    %432 = vsyncpa %s431, 1
    %433 = vsyncpa [#allocation4], 1
    %s434 = scalar_lea.sflag [#allocation4], 1
    %435 = vsyncpa %s434, 1

</llo_original>
